<compile_context>
chip_gen: v7x
topology: tpu7x:2x2x1
jax: 0.10.0
libtpu: 0.0.40
codegen_flags: <defaults>
</compile_context>

<pallas_src>
import math
import functools

import jax
import jax.numpy as jnp
from jax.experimental import pallas as pl
from jax.experimental.pallas import tpu as pltpu


def _round_up(v, m):
    return ((v + m - 1) // m) * m


def sequence_mask(lengths, max_len):
    return (jnp.arange(max_len)[None, :] < lengths[:, None]).astype(jnp.float32)


# ----------------------------- fused attention block -----------------------------

def _attn_block_kernel(lens_ref, x_ref, wqkv_ref, bqkv_ref, wo_ref, bo_ref,
                       g_ref, beta_ref, o_ref, *, n_heads, eps):
    b = pl.program_id(0)
    x = x_ref[0]                                       # (T, H) bf16
    T, H = x.shape
    Dh = H // n_heads
    scale = 1.0 / math.sqrt(Dh)

    # fused QKV projection: one (T,H)@(H,3H) MXU matmul, bf16 in / f32 acc
    qkv = jnp.dot(x, wqkv_ref[...], preferred_element_type=jnp.float32) + bqkv_ref[...]

    # key-side mask only (query rows >= L are masked downstream); no (T,T) iotas
    L = lens_ref[b]
    keymask = jax.lax.broadcasted_iota(jnp.int32, (1, T), 1) < L

    out = jnp.zeros((T, H), jnp.float32)
    for h in range(n_heads):
        qh = qkv[:, h * Dh:(h + 1) * Dh].astype(jnp.bfloat16)
        kh = qkv[:, H + h * Dh:H + (h + 1) * Dh].astype(jnp.bfloat16)
        vh = qkv[:, 2 * H + h * Dh:2 * H + (h + 1) * Dh].astype(jnp.bfloat16)
        # scores via dot_general contracting last dims (no explicit transpose)
        s = jax.lax.dot_general(qh, kh, (((1,), (1,)), ((), ())),
                                preferred_element_type=jnp.float32) * scale
        s = jnp.where(keymask, s, -1e4)                # torch masked_fill(mask==0, -1e4)
        m = jnp.max(s, axis=-1, keepdims=True)
        p = jnp.exp(s - m)
        p = p * pl.reciprocal(jnp.sum(p, axis=-1, keepdims=True), approx=True)
        head = jnp.dot(p.astype(jnp.bfloat16), vh, preferred_element_type=jnp.float32)
        # per-head output projection accumulation (no head concat)
        out = out + jnp.dot(head.astype(jnp.bfloat16),
                            wo_ref[h * Dh:(h + 1) * Dh, :],
                            preferred_element_type=jnp.float32)
    out = out + bo_ref[...]

    # residual + LayerNorm in f32 (dropout = identity at inference)
    z = x.astype(jnp.float32) + out
    mean = jnp.mean(z, axis=-1, keepdims=True)
    var = jnp.mean(jnp.square(z - mean), axis=-1, keepdims=True)
    o_ref[0] = ((z - mean) * jax.lax.rsqrt(var + eps) * g_ref[...]
                + beta_ref[...]).astype(o_ref.dtype)


def pallas_attn_block(x, x_lengths, lp, n_heads):
    """One grid step per batch element: QKV proj + masked MHA + out proj +
    residual + LayerNorm fused into a single kernel. Activations stream bf16."""
    B, T, H = x.shape
    kernel = functools.partial(_attn_block_kernel, n_heads=n_heads, eps=1e-5)
    return pl.pallas_call(
        kernel,
        out_shape=jax.ShapeDtypeStruct((B, T, H), jnp.bfloat16),
        grid=(B,),
        in_specs=[
            pl.BlockSpec(memory_space=pltpu.MemorySpace.SMEM),      # x_lengths (B,)
            pl.BlockSpec((1, T, H), lambda b: (b, 0, 0)),
            pl.BlockSpec((H, 3 * H), lambda b: (0, 0)),
            pl.BlockSpec((1, 3 * H), lambda b: (0, 0)),
            pl.BlockSpec((H, H), lambda b: (0, 0)),
            pl.BlockSpec((1, H), lambda b: (0, 0)),
            pl.BlockSpec((1, H), lambda b: (0, 0)),
            pl.BlockSpec((1, H), lambda b: (0, 0)),
        ],
        out_specs=pl.BlockSpec((1, T, H), lambda b: (b, 0, 0)),
        compiler_params=pltpu.CompilerParams(
            dimension_semantics=("parallel",),
            vmem_limit_bytes=32 * 1024 * 1024),
    )(x_lengths.astype(jnp.int32), x, lp["wqkv"], lp["bqkv"],
      lp["wo"], lp["bo"], lp["ln1_g"], lp["ln1_b"])


# ----------------------------- fused conv1d block -----------------------------

def _conv_block_kernel(lens_ref, x_ref, w_ref, b_ref, *rest,
                       k, activation, mask_out, has_residual, has_ln, eps):
    o_ref = rest[-1]
    idx = 0
    res_ref = None
    if has_residual:
        res_ref = rest[idx]
        idx += 1
    if has_ln:
        g_ref, beta_ref = rest[idx], rest[idx + 1]

    b = pl.program_id(0)
    L = lens_ref[b]
    x = x_ref[0]                                       # (T, C_in) bf16
    T = x.shape[0]
    row_valid = jax.lax.broadcasted_iota(jnp.int32, (T, 1), 0) < L
    xm = jnp.where(row_valid, x, jnp.zeros_like(x)).astype(jnp.bfloat16)

    if k == 1:
        acc = jnp.dot(xm, w_ref[0], preferred_element_type=jnp.float32)
    else:
        pad = k // 2
        zeros = jnp.zeros((pad, xm.shape[1]), xm.dtype)
        xp = jnp.concatenate([zeros, xm, zeros], axis=0)   # in-VMEM pad, no HBM copy
        acc = jnp.dot(xp[0:T, :], w_ref[0], preferred_element_type=jnp.float32)
        for j in range(1, k):
            acc = acc + jnp.dot(xp[j:j + T, :], w_ref[j],
                                preferred_element_type=jnp.float32)
    acc = acc + b_ref[...]
    if activation == "relu":
        acc = jnp.maximum(acc, 0.0)
    if mask_out:
        acc = jnp.where(row_valid, acc, 0.0)
    if has_residual:
        acc = acc + res_ref[0].astype(jnp.float32)
    if has_ln:
        mean = jnp.mean(acc, axis=-1, keepdims=True)
        var = jnp.mean(jnp.square(acc - mean), axis=-1, keepdims=True)
        acc = (acc - mean) * jax.lax.rsqrt(var + eps) * g_ref[...] + beta_ref[...]
    o_ref[0] = acc.astype(o_ref.dtype)


def pallas_conv_block(x, x_lengths, w, b, *, activation=None, mask_out=False,
                      residual=None, ln=None, out_dtype=jnp.bfloat16):
    """Channels-last Conv1d ('same', odd k) with fused length mask, bias, ReLU,
    output mask, residual add and LayerNorm. x: (B,T,C_in) bf16; w packed as
    (k, C_in, C_out) bf16. Grid = one step per batch element."""
    B, T, C_in = x.shape
    k, _, C_out = w.shape
    assert k % 2 == 1
    in_specs = [
        pl.BlockSpec(memory_space=pltpu.MemorySpace.SMEM),          # x_lengths (B,)
        pl.BlockSpec((1, T, C_in), lambda i: (i, 0, 0)),
        pl.BlockSpec((k, C_in, C_out), lambda i: (0, 0, 0)),
        pl.BlockSpec((1, C_out), lambda i: (0, 0)),
    ]
    args = [x_lengths.astype(jnp.int32), x, w, b]
    if residual is not None:
        in_specs.append(pl.BlockSpec((1, T, C_out), lambda i: (i, 0, 0)))
        args.append(residual)
    if ln is not None:
        in_specs.append(pl.BlockSpec((1, C_out), lambda i: (0, 0)))
        in_specs.append(pl.BlockSpec((1, C_out), lambda i: (0, 0)))
        args += [ln[0], ln[1]]
    kernel = functools.partial(_conv_block_kernel, k=k, activation=activation,
                               mask_out=mask_out,
                               has_residual=residual is not None,
                               has_ln=ln is not None, eps=1e-5)
    return pl.pallas_call(
        kernel,
        out_shape=jax.ShapeDtypeStruct((B, T, C_out), out_dtype),
        grid=(B,),
        in_specs=in_specs,
        out_specs=pl.BlockSpec((1, T, C_out), lambda i: (i, 0, 0)),
        compiler_params=pltpu.CompilerParams(dimension_semantics=("parallel",)),
    )(*args)


# ----------------------------- alignment expansion + z_p sampling -----------------------------

def _align_zp_kernel(scale_ref, cum_ref, cumprev_ref, mp_ref, lsp_ref,
                     noise_ref, zp_ref):
    t = pl.program_id(1)
    bty = noise_ref.shape[1]
    cum = cum_ref[0]                                    # (1, T_x) f32
    cum_prev = cumprev_ref[0]                           # (1, T_x) f32
    # build the 0/1 alignment tile from cumulative durations (generate_path in-kernel)
    y_idx = (t * bty + jax.lax.broadcasted_iota(jnp.int32, (bty, 1), 0)
             ).astype(jnp.float32)
    attn = jnp.logical_and(y_idx < cum, y_idx >= cum_prev).astype(jnp.bfloat16)
    m = jnp.dot(attn, mp_ref[0], preferred_element_type=jnp.float32)    # (bty, C)
    ls = jnp.dot(attn, lsp_ref[0], preferred_element_type=jnp.float32)
    z = m + noise_ref[0] * jnp.exp(ls) * scale_ref[0]                   # (bty, C)
    zp_ref[0] = jnp.transpose(z, (1, 0))                # emit NCL (C, bty) directly


def pallas_align_zp(noise_key, noise_scale, cum, cum_prev, m_p_cl, logs_p_cl,
                    T_y, block_ty=512):
    """Fused: in-kernel generate_path + m_p/logs_p expansion + z_p sampling,
    tiled over T_y, output directly in torch NCL layout (B, C, T_y)."""
    B, T_x, C = m_p_cl.shape
    if T_y >= block_ty:
        T_y_pad, bty = _round_up(T_y, block_ty), block_ty
    else:
        T_y_pad = _round_up(T_y, 8)
        bty = T_y_pad
    # TODO(synk): pltpu.prng_seed/stateful_normal would keep the noise in-kernel
    #             (no HBM stream) but lack an interpret-mode lowering.
    noise = jax.random.normal(noise_key, (B, T_y_pad, C), jnp.float32)
    z = pl.pallas_call(
        _align_zp_kernel,
        out_shape=jax.ShapeDtypeStruct((B, C, T_y_pad), jnp.float32),
        grid=(B, T_y_pad // bty),
        in_specs=[
            pl.BlockSpec(memory_space=pltpu.MemorySpace.SMEM),        # noise_scale (1,)
            pl.BlockSpec((1, 1, T_x), lambda b, t: (b, 0, 0)),        # cum
            pl.BlockSpec((1, 1, T_x), lambda b, t: (b, 0, 0)),        # cum_prev
            pl.BlockSpec((1, T_x, C), lambda b, t: (b, 0, 0)),        # m_p (resident)
            pl.BlockSpec((1, T_x, C), lambda b, t: (b, 0, 0)),        # logs_p (resident)
            pl.BlockSpec((1, bty, C), lambda b, t: (b, t, 0)),        # noise
        ],
        out_specs=pl.BlockSpec((1, C, bty), lambda b, t: (b, 0, t)),
        compiler_params=pltpu.CompilerParams(
            dimension_semantics=("parallel", "parallel")),
    )(jnp.reshape(noise_scale, (1,)).astype(jnp.float32),
      cum.reshape(B, 1, T_x).astype(jnp.float32),
      cum_prev.reshape(B, 1, T_x).astype(jnp.float32),
      m_p_cl.astype(jnp.bfloat16), logs_p_cl.astype(jnp.bfloat16), noise)
    return z[:, :, :T_y]


# ----------------------------- full VitsEncoder.forward -----------------------------

def vits_encoder_forward(params, cfg, tokens, x_lengths, scales, noise_key):
    B, T_x = tokens.shape
    H = cfg["hidden"]
    n_heads = cfg["n_heads"]

    # ---- gen.enc_p (TextEncoder) ----
    x = jnp.take(params["emb"], tokens, axis=0) * math.sqrt(H)      # (B, T, H) f32
    x_mask = sequence_mask(x_lengths, T_x)                          # (B, T) f32
    x = (x * x_mask[:, :, None]).astype(jnp.bfloat16)               # bf16 stream
    for lp in params["layers"]:
        x = pallas_attn_block(x, x_lengths, lp, n_heads)            # attn + res + LN1
        h1 = pallas_conv_block(x, x_lengths, lp["ffn_w1"], lp["ffn_b1"],
                               activation="relu")                   # FFN conv1
        x = pallas_conv_block(h1, x_lengths, lp["ffn_w2"], lp["ffn_b2"],
                              mask_out=True, residual=x,
                              ln=(lp["ln2_g"], lp["ln2_b"]))        # FFN conv2 + res + LN2
    stats = pallas_conv_block(x, x_lengths, params["proj_w"], params["proj_b"],
                              mask_out=True, out_dtype=jnp.bfloat16)  # (B,T,2C)
    m_p_cl, logs_p_cl = jnp.split(stats, 2, axis=-1)                # (B, T, C) each

    # ---- speaker embedding ----
    g = None                                                        # n_speakers == 1

    # ---- gen.dp (DurationPredictor, use_sdp=False) ----
    dp = params["dp"]
    y = pallas_conv_block(x, x_lengths, dp["w1"], dp["b1"], activation="relu",
                          ln=(dp["ln1_g"], dp["ln1_b"]))
    y = pallas_conv_block(y, x_lengths, dp["w2"], dp["b2"], activation="relu",
                          ln=(dp["ln2_g"], dp["ln2_b"]))
    # final 1-channel projection in plain JAX (1-lane Pallas output -> masked stores)
    y = y.astype(jnp.float32) * x_mask[:, :, None]
    logw = jnp.einsum("btc,c->bt", y, dp["wp"]) + dp["bp"][0]
    logw = logw * x_mask                                            # (B, T)

    noise_scale = scales[0]
    length_scale = scales[1]
    w = jnp.exp(logw) * x_mask * length_scale
    w_ceil = jnp.ceil(w)                                            # (B, T)
    y_lengths = jnp.maximum(jnp.sum(w_ceil, axis=1), 1.0).astype(jnp.int32)
    # TODO(synk): replace the host sync with a static padded T_y bucket to keep dispatch async.
    T_y = int(jax.device_get(jnp.max(y_lengths)))                   # torch dynamic y_lengths.max()

    y_mask = sequence_mask(y_lengths, T_y)                          # (B, T_y)
    cum = jnp.cumsum(w_ceil, axis=1)                                # (B, T)
    cum_prev = cum - w_ceil                                         # shifted cumsum

    z_p = pallas_align_zp(noise_key, noise_scale, cum, cum_prev,
                          m_p_cl, logs_p_cl, T_y)                   # (B, C, T_y) torch NCL
    return z_p, y_mask[:, None, :], g


# ----------------------------- parameters -----------------------------

def init_params(key, cfg):
    n_vocab, H, filt = cfg["n_vocab"], cfg["hidden"], cfg["filter"]
    n_layers, C_out, ks, dp_filt = (cfg["n_layers"], cfg["inter_channels"],
                                    cfg["kernel_size"], cfg["dp_filter"])
    kit = iter(jax.random.split(key, 16 + 8 * n_layers))

    def nrm(shape, scale=0.1):
        return jax.random.normal(next(kit), shape, jnp.float32) * scale

    params = {
        "emb": jax.random.normal(next(kit), (n_vocab, H), jnp.float32) * (H ** -0.5),
        "layers": [],
        "proj_w": nrm((2 * C_out, H, 1)),
        "proj_b": jnp.zeros((2 * C_out,), jnp.float32),
        "dp": {
            "w1": nrm((dp_filt, H, ks)), "b1": jnp.zeros((dp_filt,), jnp.float32),
            "ln1_g": jnp.ones((dp_filt,), jnp.float32), "ln1_b": jnp.zeros((dp_filt,), jnp.float32),
            "w2": nrm((dp_filt, dp_filt, ks)), "b2": jnp.zeros((dp_filt,), jnp.float32),
            "ln2_g": jnp.ones((dp_filt,), jnp.float32), "ln2_b": jnp.zeros((dp_filt,), jnp.float32),
            "wp": nrm((1, dp_filt, 1)), "bp": jnp.zeros((1,), jnp.float32),
        },
    }
    for _ in range(n_layers):
        params["layers"].append({
            "wq": nrm((H, H)), "bq": jnp.zeros((H,), jnp.float32),
            "wk": nrm((H, H)), "bk": jnp.zeros((H,), jnp.float32),
            "wv": nrm((H, H)), "bv": jnp.zeros((H,), jnp.float32),
            "wo": nrm((H, H)), "bo": jnp.zeros((H,), jnp.float32),
            "ln1_g": jnp.ones((H,), jnp.float32), "ln1_b": jnp.zeros((H,), jnp.float32),
            "ffn_w1": nrm((filt, H, ks)), "ffn_b1": jnp.zeros((filt,), jnp.float32),
            "ffn_w2": nrm((H, filt, ks)), "ffn_b2": jnp.zeros((H,), jnp.float32),
            "ln2_g": jnp.ones((H,), jnp.float32), "ln2_b": jnp.zeros((H,), jnp.float32),
        })
    return params


def prepare_params(p):
    """Pack / cast weights once (per review): QKV concat + bf16, conv weights
    transposed to (k, C_in, C_out) bf16, biases and LN params as (1, C) f32."""
    def cw(w):                                  # torch conv (C_out, C_in, k)
        return jnp.transpose(w, (2, 1, 0)).astype(jnp.bfloat16)

    def rb(v):                                  # bias / LN param -> (1, C) f32
        return v.reshape(1, -1).astype(jnp.float32)

    packed = {"emb": p["emb"].astype(jnp.float32), "layers": []}
    for lp in p["layers"]:
        packed["layers"].append({
            "wqkv": jnp.concatenate([lp["wq"], lp["wk"], lp["wv"]], axis=1).astype(jnp.bfloat16),
            "bqkv": jnp.concatenate([lp["bq"], lp["bk"], lp["bv"]]).reshape(1, -1).astype(jnp.float32),
            "wo": lp["wo"].astype(jnp.bfloat16), "bo": rb(lp["bo"]),
            "ln1_g": rb(lp["ln1_g"]), "ln1_b": rb(lp["ln1_b"]),
            "ffn_w1": cw(lp["ffn_w1"]), "ffn_b1": rb(lp["ffn_b1"]),
            "ffn_w2": cw(lp["ffn_w2"]), "ffn_b2": rb(lp["ffn_b2"]),
            "ln2_g": rb(lp["ln2_g"]), "ln2_b": rb(lp["ln2_b"]),
        })
    packed["proj_w"] = cw(p["proj_w"])
    packed["proj_b"] = rb(p["proj_b"])
    dp = p["dp"]
    packed["dp"] = {
        "w1": cw(dp["w1"]), "b1": rb(dp["b1"]),
        "ln1_g": rb(dp["ln1_g"]), "ln1_b": rb(dp["ln1_b"]),
        "w2": cw(dp["w2"]), "b2": rb(dp["b2"]),
        "ln2_g": rb(dp["ln2_g"]), "ln2_b": rb(dp["ln2_b"]),
        "wp": dp["wp"][0, :, 0].astype(jnp.float32),      # (dp_filt,)
        "bp": dp["bp"].astype(jnp.float32),               # (1,)
    }
    return packed


if __name__ == "__main__":
    cfg = dict(n_vocab=40, hidden=32, filter=64, n_heads=2, n_layers=2,
               inter_channels=16, kernel_size=3, dp_filter=32)

    root = jax.random.PRNGKey(0)
    k_param, k_tok, k_noise = jax.random.split(root, 3)
    params = prepare_params(init_params(k_param, cfg))

    B, T_x = 2, 16
    tokens = jax.random.randint(k_tok, (B, T_x), 0, cfg["n_vocab"], dtype=jnp.int32)
    x_lengths = jnp.array([16, 12], dtype=jnp.int32)
    scales = jnp.array([0.667, 1.0, 0.8], dtype=jnp.float32)   # [noise, length, noise_w]

    z_p, y_mask, g = vits_encoder_forward(params, cfg, tokens, x_lengths, scales, k_noise)
    jax.block_until_ready(z_p)
    jax.block_until_ready(y_mask)

    assert z_p.ndim == 3 and z_p.shape[0] == B and z_p.shape[1] == cfg["inter_channels"]
    assert y_mask.shape == (B, 1, z_p.shape[2])
    assert g is None
    assert bool(jnp.all(jnp.isfinite(z_p)))
    print("KERNEL_OK")
</pallas_src>

<mosaic_0001>
module attributes {stable_mosaic.version = 11 : i64} {
  func.func @_attn_block_kernel(%arg0: i32, %arg1: memref<2xi32, #tpu.memory_space<smem>>, %arg2: memref<1x16x32xbf16, #tpu.memory_space<vmem>>, %arg3: memref<32x96xbf16, #tpu.memory_space<vmem>>, %arg4: memref<1x96xf32, #tpu.memory_space<vmem>>, %arg5: memref<32x32xbf16, #tpu.memory_space<vmem>>, %arg6: memref<1x32xf32, #tpu.memory_space<vmem>>, %arg7: memref<1x32xf32, #tpu.memory_space<vmem>>, %arg8: memref<1x32xf32, #tpu.memory_space<vmem>>, %arg9: memref<1x16x32xbf16, #tpu.memory_space<vmem>>) attributes {dimension_semantics = [#tpu.dimension_semantics<parallel>], iteration_bounds = array<i64: 2>, scalar_prefetch = 0 : i64, scratch_operands = 0 : i64, tpu.core_type = #tpu.core_type<tc>, window_params = [{transform_indices = @transform_0, window_bounds = array<i64: 2>}, {transform_indices = @transform_1, window_bounds = array<i64: 1, 16, 32>}, {pipeline_mode = #tpu.pipeline_mode<synchronous>, transform_indices = @transform_2, window_bounds = array<i64: 32, 96>}, {pipeline_mode = #tpu.pipeline_mode<synchronous>, transform_indices = @transform_3, window_bounds = array<i64: 1, 96>}, {pipeline_mode = #tpu.pipeline_mode<synchronous>, transform_indices = @transform_4, window_bounds = array<i64: 32, 32>}, {pipeline_mode = #tpu.pipeline_mode<synchronous>, transform_indices = @transform_5, window_bounds = array<i64: 1, 32>}, {pipeline_mode = #tpu.pipeline_mode<synchronous>, transform_indices = @transform_6, window_bounds = array<i64: 1, 32>}, {pipeline_mode = #tpu.pipeline_mode<synchronous>, transform_indices = @transform_7, window_bounds = array<i64: 1, 32>}, {transform_indices = @transform_8, window_bounds = array<i64: 1, 16, 32>}]} {
    %c0 = arith.constant 0 : index
    %c0_0 = arith.constant 0 : index
    %c0_1 = arith.constant 0 : index
    %0 = vector.load %arg2[%c0, %c0_0, %c0_1] : memref<1x16x32xbf16, #tpu.memory_space<vmem>>, vector<1x16x32xbf16>
    %1 = vector.shape_cast %0 : vector<1x16x32xbf16> to vector<16x32xbf16>
    %c0_2 = arith.constant 0 : index
    %c0_3 = arith.constant 0 : index
    %2 = vector.load %arg3[%c0_2, %c0_3] : memref<32x96xbf16, #tpu.memory_space<vmem>>, vector<32x96xbf16>
    %cst = arith.constant dense<0.000000e+00> : vector<16x96xf32>
    %3 = tpu.matmul %1, %2, %cst {dimension_numbers = #tpu.dot_dimension_numbers<[1], [0], [0], [1], [0, 0, 1, 1], [], []>} : vector<16x32xbf16>, vector<32x96xbf16>, vector<16x96xf32> -> vector<16x96xf32>
    %c0_4 = arith.constant 0 : index
    %c0_5 = arith.constant 0 : index
    %4 = vector.load %arg4[%c0_4, %c0_5] : memref<1x96xf32, #tpu.memory_space<vmem>>, vector<1x96xf32>
    %5 = vector.broadcast %4 : vector<1x96xf32> to vector<16x96xf32>
    %6 = arith.addf %3, %5 : vector<16x96xf32>
    %7 = arith.index_cast %arg0 : i32 to index
    %8 = memref.load %arg1[%7] : memref<2xi32, #tpu.memory_space<smem>>
    %9 = tpu.iota {dimensions = array<i32: 1>} : vector<1x16xi32>
    %10 = vector.broadcast %8 : i32 to vector<1x16xi32>
    %11 = arith.cmpi slt, %9, %10 : vector<1x16xi32>
    %cst_6 = arith.constant 0.000000e+00 : f32
    %12 = vector.broadcast %cst_6 : f32 to vector<16x32xf32>
    %13 = vector.extract_strided_slice %6 {offsets = [0, 0], sizes = [16, 16], strides = [1, 1]} : vector<16x96xf32> to vector<16x16xf32>
    %14 = arith.truncf %13 : vector<16x16xf32> to vector<16x16xbf16>
    %15 = vector.extract_strided_slice %6 {offsets = [0, 32], sizes = [16, 16], strides = [1, 1]} : vector<16x96xf32> to vector<16x16xf32>
    %16 = arith.truncf %15 : vector<16x16xf32> to vector<16x16xbf16>
    %17 = vector.extract_strided_slice %6 {offsets = [0, 64], sizes = [16, 16], strides = [1, 1]} : vector<16x96xf32> to vector<16x16xf32>
    %18 = arith.truncf %17 : vector<16x16xf32> to vector<16x16xbf16>
    %cst_7 = arith.constant dense<0.000000e+00> : vector<16x16xf32>
    %19 = tpu.matmul %14, %16, %cst_7 {dimension_numbers = #tpu.dot_dimension_numbers<[1], [1], [0], [0], [0, 0, 1, 0], [], []>} : vector<16x16xbf16>, vector<16x16xbf16>, vector<16x16xf32> -> vector<16x16xf32>
    %cst_8 = arith.constant 2.500000e-01 : f32
    %20 = vector.broadcast %cst_8 : f32 to vector<16x16xf32>
    %21 = arith.mulf %19, %20 : vector<16x16xf32>
    %cst_9 = arith.constant -1.000000e+04 : f32
    %22 = vector.shape_cast %11 : vector<1x16xi1> to vector<1x16xi1>
    %23 = vector.broadcast %22 : vector<1x16xi1> to vector<16x16xi1>
    %24 = vector.broadcast %cst_9 : f32 to vector<16x16xf32>
    %25 = arith.select %23, %21, %24 : vector<16x16xi1>, vector<16x16xf32>
    %cst_10 = arith.constant dense<0xFF800000> : vector<16xf32>
    %26 = vector.multi_reduction <maximumf>, %25, %cst_10 [1] : vector<16x16xf32> to vector<16xf32>
    %27 = vector.shape_cast %26 : vector<16xf32> to vector<16x1xf32>
    %28 = vector.broadcast %27 : vector<16x1xf32> to vector<16x16xf32>
    %29 = arith.subf %25, %28 : vector<16x16xf32>
    %30 = math.exp %29 : vector<16x16xf32>
    %cst_11 = arith.constant dense<0.000000e+00> : vector<16xf32>
    %31 = vector.multi_reduction <add>, %30, %cst_11 [1] : vector<16x16xf32> to vector<16xf32>
    %32 = vector.shape_cast %31 : vector<16xf32> to vector<16x1xf32>
    %33 = tpu.reciprocal %32 {approx = true} : vector<16x1xf32> -> vector<16x1xf32>
    %34 = vector.broadcast %33 : vector<16x1xf32> to vector<16x16xf32>
    %35 = arith.mulf %30, %34 : vector<16x16xf32>
    %36 = arith.truncf %35 : vector<16x16xf32> to vector<16x16xbf16>
    %cst_12 = arith.constant dense<0.000000e+00> : vector<16x16xf32>
    %37 = tpu.matmul %36, %18, %cst_12 {dimension_numbers = #tpu.dot_dimension_numbers<[1], [0], [0], [1], [0, 0, 1, 1], [], []>} : vector<16x16xbf16>, vector<16x16xbf16>, vector<16x16xf32> -> vector<16x16xf32>
    %38 = arith.truncf %37 : vector<16x16xf32> to vector<16x16xbf16>
    %c0_13 = arith.constant 0 : index
    %c0_14 = arith.constant 0 : index
    %39 = vector.load %arg5[%c0_13, %c0_14] : memref<32x32xbf16, #tpu.memory_space<vmem>>, vector<16x32xbf16>
    %cst_15 = arith.constant dense<0.000000e+00> : vector<16x32xf32>
    %40 = tpu.matmul %38, %39, %cst_15 {dimension_numbers = #tpu.dot_dimension_numbers<[1], [0], [0], [1], [0, 0, 1, 1], [], []>} : vector<16x16xbf16>, vector<16x32xbf16>, vector<16x32xf32> -> vector<16x32xf32>
    %41 = arith.addf %12, %40 : vector<16x32xf32>
    %42 = vector.extract_strided_slice %6 {offsets = [0, 16], sizes = [16, 16], strides = [1, 1]} : vector<16x96xf32> to vector<16x16xf32>
    %43 = arith.truncf %42 : vector<16x16xf32> to vector<16x16xbf16>
    %44 = vector.extract_strided_slice %6 {offsets = [0, 48], sizes = [16, 16], strides = [1, 1]} : vector<16x96xf32> to vector<16x16xf32>
    %45 = arith.truncf %44 : vector<16x16xf32> to vector<16x16xbf16>
    %46 = vector.extract_strided_slice %6 {offsets = [0, 80], sizes = [16, 16], strides = [1, 1]} : vector<16x96xf32> to vector<16x16xf32>
    %47 = arith.truncf %46 : vector<16x16xf32> to vector<16x16xbf16>
    %cst_16 = arith.constant dense<0.000000e+00> : vector<16x16xf32>
    %48 = tpu.matmul %43, %45, %cst_16 {dimension_numbers = #tpu.dot_dimension_numbers<[1], [1], [0], [0], [0, 0, 1, 0], [], []>} : vector<16x16xbf16>, vector<16x16xbf16>, vector<16x16xf32> -> vector<16x16xf32>
    %cst_17 = arith.constant 2.500000e-01 : f32
    %49 = vector.broadcast %cst_17 : f32 to vector<16x16xf32>
    %50 = arith.mulf %48, %49 : vector<16x16xf32>
    %cst_18 = arith.constant -1.000000e+04 : f32
    %51 = vector.shape_cast %11 : vector<1x16xi1> to vector<1x16xi1>
    %52 = vector.broadcast %51 : vector<1x16xi1> to vector<16x16xi1>
    %53 = vector.broadcast %cst_18 : f32 to vector<16x16xf32>
    %54 = arith.select %52, %50, %53 : vector<16x16xi1>, vector<16x16xf32>
    %cst_19 = arith.constant dense<0xFF800000> : vector<16xf32>
    %55 = vector.multi_reduction <maximumf>, %54, %cst_19 [1] : vector<16x16xf32> to vector<16xf32>
    %56 = vector.shape_cast %55 : vector<16xf32> to vector<16x1xf32>
    %57 = vector.broadcast %56 : vector<16x1xf32> to vector<16x16xf32>
    %58 = arith.subf %54, %57 : vector<16x16xf32>
    %59 = math.exp %58 : vector<16x16xf32>
    %cst_20 = arith.constant dense<0.000000e+00> : vector<16xf32>
    %60 = vector.multi_reduction <add>, %59, %cst_20 [1] : vector<16x16xf32> to vector<16xf32>
    %61 = vector.shape_cast %60 : vector<16xf32> to vector<16x1xf32>
    %62 = tpu.reciprocal %61 {approx = true} : vector<16x1xf32> -> vector<16x1xf32>
    %63 = vector.broadcast %62 : vector<16x1xf32> to vector<16x16xf32>
    %64 = arith.mulf %59, %63 : vector<16x16xf32>
    %65 = arith.truncf %64 : vector<16x16xf32> to vector<16x16xbf16>
    %cst_21 = arith.constant dense<0.000000e+00> : vector<16x16xf32>
    %66 = tpu.matmul %65, %47, %cst_21 {dimension_numbers = #tpu.dot_dimension_numbers<[1], [0], [0], [1], [0, 0, 1, 1], [], []>} : vector<16x16xbf16>, vector<16x16xbf16>, vector<16x16xf32> -> vector<16x16xf32>
    %67 = arith.truncf %66 : vector<16x16xf32> to vector<16x16xbf16>
    %c16 = arith.constant 16 : index
    %c0_22 = arith.constant 0 : index
    %68 = vector.load %arg5[%c16, %c0_22] : memref<32x32xbf16, #tpu.memory_space<vmem>>, vector<16x32xbf16>
    %cst_23 = arith.constant dense<0.000000e+00> : vector<16x32xf32>
    %69 = tpu.matmul %67, %68, %cst_23 {dimension_numbers = #tpu.dot_dimension_numbers<[1], [0], [0], [1], [0, 0, 1, 1], [], []>} : vector<16x16xbf16>, vector<16x32xbf16>, vector<16x32xf32> -> vector<16x32xf32>
    %70 = arith.addf %41, %69 : vector<16x32xf32>
    %c0_24 = arith.constant 0 : index
    %c0_25 = arith.constant 0 : index
    %71 = vector.load %arg6[%c0_24, %c0_25] : memref<1x32xf32, #tpu.memory_space<vmem>>, vector<1x32xf32>
    %72 = vector.broadcast %71 : vector<1x32xf32> to vector<16x32xf32>
    %73 = arith.addf %70, %72 : vector<16x32xf32>
    %74 = arith.extf %1 : vector<16x32xbf16> to vector<16x32xf32>
    %75 = arith.addf %74, %73 : vector<16x32xf32>
    %cst_26 = arith.constant dense<0.000000e+00> : vector<16xf32>
    %76 = vector.multi_reduction <add>, %75, %cst_26 [1] : vector<16x32xf32> to vector<16xf32>
    %77 = vector.shape_cast %76 : vector<16xf32> to vector<16x1xf32>
    %cst_27 = arith.constant 3.200000e+01 : f32
    %78 = vector.broadcast %cst_27 : f32 to vector<16x1xf32>
    %79 = arith.divf %77, %78 : vector<16x1xf32>
    %80 = vector.broadcast %79 : vector<16x1xf32> to vector<16x32xf32>
    %81 = arith.subf %75, %80 : vector<16x32xf32>
    %82 = arith.mulf %81, %81 : vector<16x32xf32>
    %cst_28 = arith.constant dense<0.000000e+00> : vector<16xf32>
    %83 = vector.multi_reduction <add>, %82, %cst_28 [1] : vector<16x32xf32> to vector<16xf32>
    %84 = vector.shape_cast %83 : vector<16xf32> to vector<16x1xf32>
    %cst_29 = arith.constant 3.200000e+01 : f32
    %85 = vector.broadcast %cst_29 : f32 to vector<16x1xf32>
    %86 = arith.divf %84, %85 : vector<16x1xf32>
    %87 = vector.broadcast %79 : vector<16x1xf32> to vector<16x32xf32>
    %88 = arith.subf %75, %87 : vector<16x32xf32>
    %cst_30 = arith.constant 9.99999974E-6 : f32
    %89 = vector.broadcast %cst_30 : f32 to vector<16x1xf32>
    %90 = arith.addf %86, %89 : vector<16x1xf32>
    %91 = math.rsqrt %90 : vector<16x1xf32>
    %92 = vector.broadcast %91 : vector<16x1xf32> to vector<16x32xf32>
    %93 = arith.mulf %88, %92 : vector<16x32xf32>
    %c0_31 = arith.constant 0 : index
    %c0_32 = arith.constant 0 : index
    %94 = vector.load %arg7[%c0_31, %c0_32] : memref<1x32xf32, #tpu.memory_space<vmem>>, vector<1x32xf32>
    %95 = vector.broadcast %94 : vector<1x32xf32> to vector<16x32xf32>
    %96 = arith.mulf %93, %95 : vector<16x32xf32>
    %c0_33 = arith.constant 0 : index
    %c0_34 = arith.constant 0 : index
    %97 = vector.load %arg8[%c0_33, %c0_34] : memref<1x32xf32, #tpu.memory_space<vmem>>, vector<1x32xf32>
    %98 = vector.broadcast %97 : vector<1x32xf32> to vector<16x32xf32>
    %99 = arith.addf %96, %98 : vector<16x32xf32>
    %100 = arith.truncf %99 : vector<16x32xf32> to vector<16x32xbf16>
    %c0_35 = arith.constant 0 : index
    %c0_36 = arith.constant 0 : index
    %c0_37 = arith.constant 0 : index
    %101 = vector.load %arg9[%c0_35, %c0_36, %c0_37] : memref<1x16x32xbf16, #tpu.memory_space<vmem>>, vector<1x16x32xbf16>
    %102 = vector.shape_cast %101 : vector<1x16x32xbf16> to vector<16x32xbf16>
    %103 = vector.shape_cast %100 : vector<16x32xbf16> to vector<1x16x32xbf16>
    tpu.vector_store %arg9[%c0_35, %c0_36, %c0_37], %103 {strides = array<i32>} : memref<1x16x32xbf16, #tpu.memory_space<vmem>>, vector<1x16x32xbf16>,
    return
  }
  func.func @transform_0(%arg0: i32) -> i32 {
    %c0_i32 = arith.constant 0 : i32
    %c0_i32_0 = arith.constant 0 : i32
    return %c0_i32 : i32
  }
  func.func @transform_1(%arg0: i32) -> (i32, i32, i32) {
    %c0_i32 = arith.constant 0 : i32
    %c0_i32_0 = arith.constant 0 : i32
    %c0_i32_1 = arith.constant 0 : i32
    return %arg0, %c0_i32, %c0_i32_0 : i32, i32, i32
  }
  func.func @transform_2(%arg0: i32) -> (i32, i32) {
    %c0_i32 = arith.constant 0 : i32
    %c0_i32_0 = arith.constant 0 : i32
    %c0_i32_1 = arith.constant 0 : i32
    return %c0_i32, %c0_i32_0 : i32, i32
  }
  func.func @transform_3(%arg0: i32) -> (i32, i32) {
    %c0_i32 = arith.constant 0 : i32
    %c0_i32_0 = arith.constant 0 : i32
    %c0_i32_1 = arith.constant 0 : i32
    return %c0_i32, %c0_i32_0 : i32, i32
  }
  func.func @transform_4(%arg0: i32) -> (i32, i32) {
    %c0_i32 = arith.constant 0 : i32
    %c0_i32_0 = arith.constant 0 : i32
    %c0_i32_1 = arith.constant 0 : i32
    return %c0_i32, %c0_i32_0 : i32, i32
  }
  func.func @transform_5(%arg0: i32) -> (i32, i32) {
    %c0_i32 = arith.constant 0 : i32
    %c0_i32_0 = arith.constant 0 : i32
    %c0_i32_1 = arith.constant 0 : i32
    return %c0_i32, %c0_i32_0 : i32, i32
  }
  func.func @transform_6(%arg0: i32) -> (i32, i32) {
    %c0_i32 = arith.constant 0 : i32
    %c0_i32_0 = arith.constant 0 : i32
    %c0_i32_1 = arith.constant 0 : i32
    return %c0_i32, %c0_i32_0 : i32, i32
  }
  func.func @transform_7(%arg0: i32) -> (i32, i32) {
    %c0_i32 = arith.constant 0 : i32
    %c0_i32_0 = arith.constant 0 : i32
    %c0_i32_1 = arith.constant 0 : i32
    return %c0_i32, %c0_i32_0 : i32, i32
  }
  func.func @transform_8(%arg0: i32) -> (i32, i32, i32) {
    %c0_i32 = arith.constant 0 : i32
    %c0_i32_0 = arith.constant 0 : i32
    %c0_i32_1 = arith.constant 0 : i32
    return %arg0, %c0_i32, %c0_i32_0 : i32, i32, i32
  }
}

</mosaic_0001>

<llo_original>
// kernel: tpu_custom_call.1
$region0: #{tpu_custom_call.1}
  #allocation0 [shape = 'u32[]', space=smem, size = 0x4, offset = 0x4, fixed_abs, tag = 'smem constant byte address 0x4 - core index']
  #allocation1 [shape = 'u32[144,128]{1,0:T(1,128)}', space=vmem, size = 0x12000, scoped, tag = 'internal scratch']
  %s0 = inlined_call_operand.hbm [shape: s32[2], index: 0, kind: input, shape index: {}]
  %s1 = inlined_call_operand.hbm [shape: bf16[2,16,32], index: 1, kind: input, shape index: {}]
  %s2 = inlined_call_operand.hbm [shape: bf16[32,96], index: 2, kind: input, shape index: {}]
  %s3 = inlined_call_operand.vmem [shape: f32[1,96], index: 3, kind: input, shape index: {}]
  %s4 = inlined_call_operand.hbm [shape: bf16[32,32], index: 4, kind: input, shape index: {}]
  %s5 = inlined_call_operand.vmem [shape: f32[1,32], index: 5, kind: input, shape index: {}]
  %s6 = inlined_call_operand.vmem [shape: f32[1,32], index: 6, kind: input, shape index: {}]
  %s7 = inlined_call_operand.vmem [shape: f32[1,32], index: 7, kind: input, shape index: {}]
  %s8 = inlined_call_operand.hbm [shape: bf16[2,16,32], index: 8, kind: output, shape index: {}]
  %s9 = sld [smem:[#allocation0]]
  $region81: #{tpu_custom_call.1} parent=0
    _
  %s11 = ssub.s32 1, %s9
  %s12 = scalar_select 0, %s11, %s9
  $region1: #{tpu_custom_call.1} parent=0
    #allocation2 [shape = 'u8[512]{0}', space=smem, size = 0x200, scoped, tag = 'input window, operand 0, single buffered']
    #allocation3 [shape = 's32[2]{0}', space=sflag, size = 0x8, scoped, tag = 'scoped memory for tpu_custom_call.1']
    #allocation4 [shape = 's32[2]{0}', space=sflag, size = 0x8, scoped, tag = 'scoped memory for tpu_custom_call.1']
    #allocation5 [shape = 's32[2]{0}', space=sflag, size = 0x8, scoped, tag = 'scoped memory for tpu_custom_call.1']
    #allocation6 [shape = 'u8[8192]{0}', space=vmem, size = 0x2000, scoped, tag = 'input window, operand 1']
    #allocation7 [shape = 'u8[8192]{0}', space=vmem, size = 0x2000, scoped, tag = 'input window, operand 2, single buffered']
    #allocation8 [shape = 's32[1]{0}', space=sflag, size = 0x4, scoped, tag = 'scoped memory for tpu_custom_call.1']
    #allocation9 [shape = 'u8[8192]{0}', space=vmem, size = 0x2000, scoped, tag = 'input window, operand 4, single buffered']
    #allocation10 [shape = 'u8[8192]{0}', space=vmem, size = 0x2000, scoped, tag = 'output window, operand 0']
    %13 = vsyncpa [#allocation5], 0
    %14 = vsyncpa [#allocation3], 0
    %s15 = scalar_lea.sflag [#allocation3], 1
    %16 = vsyncpa %s15, 0
    %17 = vsyncpa [#allocation8], 0
    %18 = vsyncpa [#allocation4], 0
    %s19 = scalar_lea.sflag [#allocation4], 1
    %20 = vsyncpa %s19, 0
    loop: start=0, step=1, limit=4
    $region2: #{tpu_custom_call.1} parent=1 // loop_pre_header
      _
    $region3: #{tpu_custom_call.1} parent=1 // loop_header
      %s22 = sphi 0, %s26
      %p23 = scmp.ge.s32.totalorder %s22, 4
      %s30 = sphi 0, %s30
      %s32 = sphi 0, %s30
      %s33 = sphi 0, %s32
      %s47 = sphi 0, %s33
      %s53 = sphi 0, %s55
      %s56 = sphi 0, %s53
      %s57 = sphi 0, %s56
      %s73 = sphi 0, %s57
      %s77 = sphi 0, %s77
      %s79 = sphi 0, %s77
      %s80 = sphi 0, %s79
      %s94 = sphi 0, %s80
      %s98 = sphi 0, %s98
      %s100 = sphi 0, %s98
      %s101 = sphi 0, %s100
      %s115 = sphi 0, %s101
      %s119 = sphi 0, %s119
      %s121 = sphi 0, %s119
      %s122 = sphi 0, %s121
      %s136 = sphi 0, %s122
      %s140 = sphi 0, %s140
      %s142 = sphi 0, %s140
      %s143 = sphi 0, %s142
      %s157 = sphi 0, %s143
      %s161 = sphi 0, %s161
      %s163 = sphi 0, %s161
      %s164 = sphi 0, %s163
      %s178 = sphi 0, %s164
      %s182 = sphi 0, %s182
      %s184 = sphi 0, %s182
      %s185 = sphi 0, %s184
      %s199 = sphi 0, %s185
      %s205 = sphi 0, %s207
      %s208 = sphi 0, %s205
      %s209 = sphi 0, %s208
      %s225 = sphi 0, %s209
    $region4: #{tpu_custom_call.1} parent=1 // loop_header_branch
      %25 = sbr.rel (%p23) target = $region8
    $region5: #{tpu_custom_call.1} parent=1 // loop_body
      %s27 = ssub.s32 %s22, 1
      %s28 = ssub.s32 %s22, 2
      %s29 = sadd.s32 %s22, 1
      %s31 = sadd.s32 %s30, 1
      %p34 = scmp.eq.s32.totalorder %s22, 1
      %p35 = scmp.ne.s32.totalorder %s30, %s32
      %p36 = scmp.eq.s32.totalorder %s22, 0
      %p37 = por %p35, %p36
      %p38 = scmp.ne.s32.totalorder %s30, %s32
      %p39 = scmp.eq.s32.totalorder %s27, 1
      %p40 = por %p38, %p39
      %p41 = scmp.ne.s32.totalorder %s32, %s33
      %p42 = scmp.eq.s32.totalorder %s27, 0
      %p43 = por %p41, %p42
      %p44 = scmp.ne.s32.totalorder %s32, %s33
      %p45 = scmp.eq.s32.totalorder %s28, 1
      %p46 = por %p44, %p45
      %p48 = scmp.ne.s32.totalorder %s33, %s47
      %p49 = scmp.eq.s32.totalorder %s28, 0
      %p50 = por %p48, %p49
      %s51 = ssub.s32 %s22, %s29
      %p52 = scmp.eq.s32.totalorder %s51, 0
      %s54 = sadd.s32 %s53, 1
      %s55 = scalar_select %p52, %s53, %s54
      %p58 = pneg %p52
      %p59 = scmp.eq.s32.totalorder %s22, 1
      %p60 = por %p58, %p59
      %p61 = scmp.ne.s32.totalorder %s53, %s56
      %p62 = scmp.eq.s32.totalorder %s22, 0
      %p63 = por %p61, %p62
      %p64 = scmp.ne.s32.totalorder %s53, %s56
      %p65 = scmp.eq.s32.totalorder %s27, 1
      %p66 = por %p64, %p65
      %p67 = scmp.ne.s32.totalorder %s56, %s57
      %p68 = scmp.eq.s32.totalorder %s27, 0
      %p69 = por %p67, %p68
      %p70 = scmp.ne.s32.totalorder %s56, %s57
      %p71 = scmp.eq.s32.totalorder %s28, 1
      %p72 = por %p70, %p71
      %p74 = scmp.ne.s32.totalorder %s57, %s73
      %p75 = scmp.eq.s32.totalorder %s28, 0
      %p76 = por %p74, %p75
      %s78 = sadd.s32 %s77, 1
      %p81 = scmp.eq.s32.totalorder %s22, 1
      %p82 = scmp.ne.s32.totalorder %s77, %s79
      %p83 = scmp.eq.s32.totalorder %s22, 0
      %p84 = por %p82, %p83
      %p85 = scmp.ne.s32.totalorder %s77, %s79
      %p86 = scmp.eq.s32.totalorder %s27, 1
      %p87 = por %p85, %p86
      %p88 = scmp.ne.s32.totalorder %s79, %s80
      %p89 = scmp.eq.s32.totalorder %s27, 0
      %p90 = por %p88, %p89
      %p91 = scmp.ne.s32.totalorder %s79, %s80
      %p92 = scmp.eq.s32.totalorder %s28, 1
      %p93 = por %p91, %p92
      %p95 = scmp.ne.s32.totalorder %s80, %s94
      %p96 = scmp.eq.s32.totalorder %s28, 0
      %p97 = por %p95, %p96
      %s99 = sadd.s32 %s98, 1
      %p102 = scmp.eq.s32.totalorder %s22, 1
      %p103 = scmp.ne.s32.totalorder %s98, %s100
      %p104 = scmp.eq.s32.totalorder %s22, 0
      %p105 = por %p103, %p104
      %p106 = scmp.ne.s32.totalorder %s98, %s100
      %p107 = scmp.eq.s32.totalorder %s27, 1
      %p108 = por %p106, %p107
      %p109 = scmp.ne.s32.totalorder %s100, %s101
      %p110 = scmp.eq.s32.totalorder %s27, 0
      %p111 = por %p109, %p110
      %p112 = scmp.ne.s32.totalorder %s100, %s101
      %p113 = scmp.eq.s32.totalorder %s28, 1
      %p114 = por %p112, %p113
      %p116 = scmp.ne.s32.totalorder %s101, %s115
      %p117 = scmp.eq.s32.totalorder %s28, 0
      %p118 = por %p116, %p117
      %s120 = sadd.s32 %s119, 1
      %p123 = scmp.eq.s32.totalorder %s22, 1
      %p124 = scmp.ne.s32.totalorder %s119, %s121
      %p125 = scmp.eq.s32.totalorder %s22, 0
      %p126 = por %p124, %p125
      %p127 = scmp.ne.s32.totalorder %s119, %s121
      %p128 = scmp.eq.s32.totalorder %s27, 1
      %p129 = por %p127, %p128
      %p130 = scmp.ne.s32.totalorder %s121, %s122
      %p131 = scmp.eq.s32.totalorder %s27, 0
      %p132 = por %p130, %p131
      %p133 = scmp.ne.s32.totalorder %s121, %s122
      %p134 = scmp.eq.s32.totalorder %s28, 1
      %p135 = por %p133, %p134
      %p137 = scmp.ne.s32.totalorder %s122, %s136
      %p138 = scmp.eq.s32.totalorder %s28, 0
      %p139 = por %p137, %p138
      %s141 = sadd.s32 %s140, 1
      %p144 = scmp.eq.s32.totalorder %s22, 1
      %p145 = scmp.ne.s32.totalorder %s140, %s142
      %p146 = scmp.eq.s32.totalorder %s22, 0
      %p147 = por %p145, %p146
      %p148 = scmp.ne.s32.totalorder %s140, %s142
      %p149 = scmp.eq.s32.totalorder %s27, 1
      %p150 = por %p148, %p149
      %p151 = scmp.ne.s32.totalorder %s142, %s143
      %p152 = scmp.eq.s32.totalorder %s27, 0
      %p153 = por %p151, %p152
      %p154 = scmp.ne.s32.totalorder %s142, %s143
      %p155 = scmp.eq.s32.totalorder %s28, 1
      %p156 = por %p154, %p155
      %p158 = scmp.ne.s32.totalorder %s143, %s157
      %p159 = scmp.eq.s32.totalorder %s28, 0
      %p160 = por %p158, %p159
      %s162 = sadd.s32 %s161, 1
      %p165 = scmp.eq.s32.totalorder %s22, 1
      %p166 = scmp.ne.s32.totalorder %s161, %s163
      %p167 = scmp.eq.s32.totalorder %s22, 0
      %p168 = por %p166, %p167
      %p169 = scmp.ne.s32.totalorder %s161, %s163
      %p170 = scmp.eq.s32.totalorder %s27, 1
      %p171 = por %p169, %p170
      %p172 = scmp.ne.s32.totalorder %s163, %s164
      %p173 = scmp.eq.s32.totalorder %s27, 0
      %p174 = por %p172, %p173
      %p175 = scmp.ne.s32.totalorder %s163, %s164
      %p176 = scmp.eq.s32.totalorder %s28, 1
      %p177 = por %p175, %p176
      %p179 = scmp.ne.s32.totalorder %s164, %s178
      %p180 = scmp.eq.s32.totalorder %s28, 0
      %p181 = por %p179, %p180
      %s183 = sadd.s32 %s182, 1
      %p186 = scmp.eq.s32.totalorder %s22, 1
      %p187 = scmp.ne.s32.totalorder %s182, %s184
      %p188 = scmp.eq.s32.totalorder %s22, 0
      %p189 = por %p187, %p188
      %p190 = scmp.ne.s32.totalorder %s182, %s184
      %p191 = scmp.eq.s32.totalorder %s27, 1
      %p192 = por %p190, %p191
      %p193 = scmp.ne.s32.totalorder %s184, %s185
      %p194 = scmp.eq.s32.totalorder %s27, 0
      %p195 = por %p193, %p194
      %p196 = scmp.ne.s32.totalorder %s184, %s185
      %p197 = scmp.eq.s32.totalorder %s28, 1
      %p198 = por %p196, %p197
      %p200 = scmp.ne.s32.totalorder %s185, %s199
      %p201 = scmp.eq.s32.totalorder %s28, 0
      %p202 = por %p200, %p201
      %s203 = ssub.s32 %s22, %s29
      %p204 = scmp.eq.s32.totalorder %s203, 0
      %s206 = sadd.s32 %s205, 1
      %s207 = scalar_select %p204, %s205, %s206
      %p210 = pneg %p204
      %p211 = scmp.eq.s32.totalorder %s22, 1
      %p212 = por %p210, %p211
      %p213 = scmp.ne.s32.totalorder %s205, %s208
      %p214 = scmp.eq.s32.totalorder %s22, 0
      %p215 = por %p213, %p214
      %p216 = scmp.ne.s32.totalorder %s205, %s208
      %p217 = scmp.eq.s32.totalorder %s27, 1
      %p218 = por %p216, %p217
      %p219 = scmp.ne.s32.totalorder %s208, %s209
      %p220 = scmp.eq.s32.totalorder %s27, 0
      %p221 = por %p219, %p220
      %p222 = scmp.ne.s32.totalorder %s208, %s209
      %p223 = scmp.eq.s32.totalorder %s28, 1
      %p224 = por %p222, %p223
      %p226 = scmp.ne.s32.totalorder %s209, %s225
      %p227 = scmp.eq.s32.totalorder %s28, 0
      %p228 = por %p226, %p227
      %p229 = scmp.le.s32.totalorder 1, %s22
      %p230 = scmp.lt.s32.totalorder %s22, 3
      %p231 = pnand %p229, %p230
      %p232 = pneg %p231
      // Predicated region
      $region9: #{tpu_custom_call.1} parent=5 // pred_check
        _
      $region10: #{tpu_custom_call.1} parent=5 // pred_check_branch
        %234 = sbr.rel (%p231) target = $region12
      $region11: #{tpu_custom_call.1} parent=5 // pred_region
        %s235 = ssub.s32 %s22, 1
        // Predicated region
        $region13: #{tpu_custom_call.1} parent=11 // pred_check
          %p236 = pneg %p43
        $region14: #{tpu_custom_call.1} parent=11 // pred_check_branch
          %238 = sbr.rel (%p236) target = $region16
        $region15: #{tpu_custom_call.1} parent=11 // pred_region
          %s240 = ssub.s32 16, 16
          %241 = vsyncadd [#allocation5], %s240
          %244 = dma.hbm_to_smem %s0, 16, [#allocation2], [#allocation5]
        $region16: #{tpu_custom_call.1} parent=11 // pred_fallthru
          _
        // Predicated region
        $region17: #{tpu_custom_call.1} parent=11 // pred_check
          %p245 = pneg %p90
        $region18: #{tpu_custom_call.1} parent=11 // pred_check_branch
          %247 = sbr.rel (%p245) target = $region20
        $region19: #{tpu_custom_call.1} parent=11 // pred_region
          %s249 = ssub.s32 256, 256
          %250 = vsyncadd [#allocation8], %s249
          %s251 = sshll.u32 [#allocation7], 4
          %s252 = int_to_ptr.vmem [resolvable:$true] %s251
          %257 = dma.hbm_to_vmem [thread:$0]  %s2, 256, %s252, [#allocation8], 64, 64, 4
        $region20: #{tpu_custom_call.1} parent=11 // pred_fallthru
          _
        // Predicated region
        $region21: #{tpu_custom_call.1} parent=11 // pred_check
          %p258 = pneg %p111
        $region22: #{tpu_custom_call.1} parent=11 // pred_check_branch
          %260 = sbr.rel (%p258) target = $region24
        $region23: #{tpu_custom_call.1} parent=11 // pred_region
          _
        $region24: #{tpu_custom_call.1} parent=11 // pred_fallthru
          _
        // Predicated region
        $region25: #{tpu_custom_call.1} parent=11 // pred_check
          %p261 = pneg %p132
        $region26: #{tpu_custom_call.1} parent=11 // pred_check_branch
          %263 = sbr.rel (%p261) target = $region28
        $region27: #{tpu_custom_call.1} parent=11 // pred_region
          %s265 = ssub.s32 256, 256
          %266 = vsyncadd [#allocation8], %s265
          %s267 = sshll.u32 [#allocation9], 4
          %s268 = int_to_ptr.vmem [resolvable:$true] %s267
          %273 = dma.hbm_to_vmem [thread:$0]  %s4, 256, %s268, [#allocation8], 64, 64, 4
        $region28: #{tpu_custom_call.1} parent=11 // pred_fallthru
          _
        // Predicated region
        $region29: #{tpu_custom_call.1} parent=11 // pred_check
          %p274 = pneg %p153
        $region30: #{tpu_custom_call.1} parent=11 // pred_check_branch
          %276 = sbr.rel (%p274) target = $region32
        $region31: #{tpu_custom_call.1} parent=11 // pred_region
          _
        $region32: #{tpu_custom_call.1} parent=11 // pred_fallthru
          _
        // Predicated region
        $region33: #{tpu_custom_call.1} parent=11 // pred_check
          %p277 = pneg %p174
        $region34: #{tpu_custom_call.1} parent=11 // pred_check_branch
          %279 = sbr.rel (%p277) target = $region36
        $region35: #{tpu_custom_call.1} parent=11 // pred_region
          _
        $region36: #{tpu_custom_call.1} parent=11 // pred_fallthru
          _
        // Predicated region
        $region37: #{tpu_custom_call.1} parent=11 // pred_check
          %p280 = pneg %p195
        $region38: #{tpu_custom_call.1} parent=11 // pred_check_branch
          %282 = sbr.rel (%p280) target = $region40
        $region39: #{tpu_custom_call.1} parent=11 // pred_region
          _
        $region40: #{tpu_custom_call.1} parent=11 // pred_fallthru
          _
      $region12: #{tpu_custom_call.1} parent=5 // pred_fallthru
        _
      %p283 = scmp.lt.s32.totalorder %s22, 2
      // Predicated region
      $region41: #{tpu_custom_call.1} parent=5 // pred_check
        %p284 = pneg %p283
      $region42: #{tpu_custom_call.1} parent=5 // pred_check_branch
        %286 = sbr.rel (%p284) target = $region44
      $region43: #{tpu_custom_call.1} parent=5 // pred_region
        // Predicated region
        $region45: #{tpu_custom_call.1} parent=43 // pred_check
          %p287 = pneg %p63
        $region46: #{tpu_custom_call.1} parent=43 // pred_check_branch
          %289 = sbr.rel (%p287) target = $region48
        $region47: #{tpu_custom_call.1} parent=43 // pred_region
          %s290 = sand.u32 %s53, 1
          %s291 = scalar_lea.sflag [#allocation3], %s290
          %s292 = sand.u32 %s53, 1
          %s293 = smul.addr %s292, 8
          %s294 = scalar_lea.vmem [#allocation6], %s293
          %s296 = ssub.s32 128, 128
          %297 = vsyncadd %s291, %s296
          %s298 = smul.addr %s22, 2
          %s299 = smul.addr %s298, 64
          %s300 = scalar_lea.hbm %s1, %s299
          %s301 = sshll.u32 %s294, 4
          %s302 = int_to_ptr.vmem [resolvable:$true] %s301
          %307 = dma.hbm_to_vmem [thread:$0]  %s300, 128, %s302, %s291, 64, 64, 4
        $region48: #{tpu_custom_call.1} parent=43 // pred_fallthru
          _
      $region44: #{tpu_custom_call.1} parent=5 // pred_fallthru
        _
      %p308 = scmp.le.s32.totalorder 1, %s22
      %p309 = scmp.lt.s32.totalorder %s22, 3
      %p310 = pnand %p308, %p309
      %p311 = pneg %p310
      // Predicated region
      $region49: #{tpu_custom_call.1} parent=5 // pred_check
        _
      $region50: #{tpu_custom_call.1} parent=5 // pred_check_branch
        %313 = sbr.rel (%p310) target = $region52
      $region51: #{tpu_custom_call.1} parent=5 // pred_region
        %s314 = ssub.s32 %s22, 1
        // Predicated region
        $region53: #{tpu_custom_call.1} parent=51 // pred_check
          %p315 = pneg %p43
        $region54: #{tpu_custom_call.1} parent=51 // pred_check_branch
          %317 = sbr.rel (%p315) target = $region56
        $region55: #{tpu_custom_call.1} parent=51 // pred_region
          %318 = dma.done [#allocation5], 16
        $region56: #{tpu_custom_call.1} parent=51 // pred_fallthru
          _
        %s319 = sand.u32 %s56, 1
        %s320 = scalar_lea.sflag [#allocation3], %s319
        %s321 = sand.u32 %s56, 1
        %s322 = smul.addr %s321, 8
        %s323 = scalar_lea.vmem [#allocation6], %s322
        // Predicated region
        $region57: #{tpu_custom_call.1} parent=51 // pred_check
          %p324 = pneg %p69
        $region58: #{tpu_custom_call.1} parent=51 // pred_check_branch
          %326 = sbr.rel (%p324) target = $region60
        $region59: #{tpu_custom_call.1} parent=51 // pred_region
          %327 = dma.done %s320, 128
        $region60: #{tpu_custom_call.1} parent=51 // pred_fallthru
          _
        // Predicated region
        $region61: #{tpu_custom_call.1} parent=51 // pred_check
          %p328 = pneg %p90
        $region62: #{tpu_custom_call.1} parent=51 // pred_check_branch
          %330 = sbr.rel (%p328) target = $region64
        $region63: #{tpu_custom_call.1} parent=51 // pred_region
          %331 = dma.done [#allocation8], 256
        $region64: #{tpu_custom_call.1} parent=51 // pred_fallthru
          _
        // Predicated region
        $region65: #{tpu_custom_call.1} parent=51 // pred_check
          %p332 = pneg %p132
        $region66: #{tpu_custom_call.1} parent=51 // pred_check_branch
          %334 = sbr.rel (%p332) target = $region68
        $region67: #{tpu_custom_call.1} parent=51 // pred_region
          %335 = dma.done [#allocation8], 256
        $region68: #{tpu_custom_call.1} parent=51 // pred_fallthru
          _
        %336 = sfence
        %p337 = pneg %p43
        %p338 = pneg %p40
        %s339 = sand.u32 %s56, 1
        %s340 = scalar_lea.sflag [#allocation3], %s339
        %s341 = sand.u32 %s56, 1
        %s342 = smul.addr %s341, 8
        %s343 = scalar_lea.vmem [#allocation6], %s342
        %p344 = pneg %p69
        %p345 = pneg %p66
        %p346 = pneg %p90
        %p347 = pneg %p87
        %p348 = pneg %p111
        %p349 = pneg %p108
        %p350 = pneg %p132
        %p351 = pneg %p129
        %p352 = pneg %p153
        %p353 = pneg %p150
        %p354 = pneg %p174
        %p355 = pneg %p171
        %p356 = pneg %p195
        %p357 = pneg %p192
        %p358 = pneg %p221
        %p359 = pneg %p218
        %s360 = sand.u32 %s208, 1
        %s361 = scalar_lea.sflag [#allocation4], %s360
        %s362 = sand.u32 %s208, 1
        %s363 = smul.addr %s362, 8
        %s364 = scalar_lea.vmem [#allocation10], %s363
        %v366 = vld [vmem:[%s323] sm:$0xf]
        %v367 = vld [vmem:[%s323 + $0x4] sm:$0xf]
        %v368 = vld [vmem:[#allocation7] sm:$0xf]
        %v369 = vld [vmem:[#allocation7 + $0x4] sm:$0xf]
        %v370 = vld [vmem:[#allocation7 + $0x8] sm:$0xf]
        %v371 = vld [vmem:[#allocation7 + $0xc] sm:$0xf]
        %v372 = vld [vmem:[%s3] sm:$0x1]
        %v374 = vlaneseq
        %v375 = vshrl.u32 %v374, 7
        %v376 = vsub.s32 0, %v375
        %v377 = vrot.slane %v372, %v376
        %v381 = vunpack.c.l.b16 %v366
        %v382 = vunpack.c.l.b16 %v367
        %v383 = vpack.c.b16 %v382, %v381
        %v388 = vunpack.c.l.b16 %v368
        %v389 = vunpack.c.l.b16 %v369
        %v390 = vunpack.c.l.b16 %v370
        %v391 = vunpack.c.l.b16 %v371
        %v392 = vpack.c.b16 %v389, %v388
        %v393 = vpack.c.b16 %v391, %v390
        %vm396 = vcmask 261120
        %v398 = vsel %vm396, %v383, 0
        %400 = vmatprep.subr.bf16.mxu0 0
        %401 = vmatpush1.bf16.msra.mxu0 %v392
        %402 = vmatprep.subr.bf16.mxu0 0
        %403 = vmatpush1.bf16.msra.mxu0 %v393
        %404 = vmatprep.subr.bf16.mxu0 0
        %405 = vmatpush1.bf16.msra.mxu0 0
        %406 = vmatprep.subr.bf16.mxu0 0
        %407 = vmatpush1.bf16.msra.mxu0 0
        %408 = vmatprep.subr.bf16.mxu0 0
        %409 = vmatpush1.bf16.msra.mxu0 0
        %410 = vmatprep.subr.bf16.mxu0 0
        %411 = vmatpush1.bf16.msra.mxu0 0
        %412 = vmatprep.subr.bf16.mxu0 0
        %413 = vmatpush1.bf16.msra.mxu0 0
        %414 = vmatprep.subr.bf16.mxu0 0
        %415 = vmatpush1.bf16.msra.mxu0 0
        %416 = vmatprep.subr.bf16.mxu0 0
        %417 = vmatpush1.bf16.msra.mxu0 0
        %418 = vmatprep.subr.bf16.mxu0 0
        %419 = vmatpush1.bf16.msra.mxu0 0
        %420 = vmatprep.subr.bf16.mxu0 0
        %421 = vmatpush1.bf16.msra.mxu0 0
        %422 = vmatprep.subr.bf16.mxu0 0
        %423 = vmatpush1.bf16.msra.mxu0 0
        %424 = vmatprep.subr.bf16.mxu0 0
        %425 = vmatpush1.bf16.msra.mxu0 0
        %426 = vmatprep.subr.bf16.mxu0 0
        %427 = vmatpush1.bf16.msra.mxu0 0
        %428 = vmatprep.subr.bf16.mxu0 0
        %429 = vmatpush1.bf16.msra.mxu0 0
        %430 = vmatprep.subr.bf16.mxu0 0
        %431 = vmatpush1.bf16.msra.mxu0 0
        %432 = vmatprep.mubr.bf16.mxu0 0
        %433 = vmatmul.mubr.bf16.gmra.mrb[0].mxu0 %v398
        %v434 = vpop.f32.mrb[0].mxu0
        %v435 = vadd.f32 %v377, %v434
        %v436 = vpop.f32.mrb[0].mxu0
        %v437 = vpop.f32.mrb[0].mxu0
        %v438 = vadd.f32 %v377, %v437
        %v439 = vpop.f32.mrb[0].mxu0
        %440 = vdwg.mxu0
        %s441 = sld [smem:[#allocation2 + %s27]]
        %v442 = vlaneseq
        %v443 = vand.u32 %v442, 127
        %v444 = vstv %s441
        %vm445 = vcmp.lt.s32.totalorder %v443, %v444
        %v446 = vpack.c.bf16 %v438, %v435
        %448 = vrot.lane.b32.xlu0 %v446, 96
        %v449 = vpop.permute.xlu0 %448
        %vm450 = vcmask 130048
        %v452 = vsel %vm450, %v446, 0
        %v455 = vsel %vm450, %v449, 0
        %457 = vmatprep.subr.bf16.mxu0 0
        %458 = vmatpush1.bf16.xpose.msra.mxu0 %v455
        %459 = vmatprep.subr.bf16.mxu0 0
        %460 = vmatpush1.bf16.xpose.msra.mxu0 0
        %461 = vmatprep.subr.bf16.mxu0 0
        %462 = vmatpush1.bf16.xpose.msra.mxu0 0
        %463 = vmatprep.subr.bf16.mxu0 0
        %464 = vmatpush1.bf16.xpose.msra.mxu0 0
        %465 = vmatprep.subr.bf16.mxu0 0
        %466 = vmatpush1.bf16.xpose.msra.mxu0 0
        %467 = vmatprep.subr.bf16.mxu0 0
        %468 = vmatpush1.bf16.xpose.msra.mxu0 0
        %469 = vmatprep.subr.bf16.mxu0 0
        %470 = vmatpush1.bf16.xpose.msra.mxu0 0
        %471 = vmatprep.subr.bf16.mxu0 0
        %472 = vmatpush1.bf16.xpose.msra.mxu0 0
        %473 = vmatprep.subr.bf16.mxu0 0
        %474 = vmatpush1.bf16.xpose.msra.mxu0 0
        %475 = vmatprep.subr.bf16.mxu0 0
        %476 = vmatpush1.bf16.xpose.msra.mxu0 0
        %477 = vmatprep.subr.bf16.mxu0 0
        %478 = vmatpush1.bf16.xpose.msra.mxu0 0
        %479 = vmatprep.subr.bf16.mxu0 0
        %480 = vmatpush1.bf16.xpose.msra.mxu0 0
        %481 = vmatprep.subr.bf16.mxu0 0
        %482 = vmatpush1.bf16.xpose.msra.mxu0 0
        %483 = vmatprep.subr.bf16.mxu0 0
        %484 = vmatpush1.bf16.xpose.msra.mxu0 0
        %485 = vmatprep.subr.bf16.mxu0 0
        %486 = vmatpush1.bf16.xpose.msra.mxu0 0
        %487 = vmatprep.subr.bf16.mxu0 0
        %488 = vmatpush1.bf16.xpose.msra.mxu0 0
        %489 = vmatprep.mubr.bf16.mxu0 0
        %490 = vmatmul.mubr.bf16.gmra.mrb[0].mxu0 %v452
        %v491 = vpop.f32.mrb[0].mxu0
        %v492 = vadd.f32 0.0, %v491
        %v493 = vpop.f32.mrb[0].mxu0
        %v494 = vpop.f32.mrb[0].mxu0
        %v495 = vadd.f32 0.0, %v494
        %v496 = vpop.f32.mrb[0].mxu0
        %497 = vdwg.mxu0
        %v498 = vmul.f32 %v492, 0.25
        %v499 = vmul.f32 %v495, 0.25
        %v500 = vsel %vm445, 1, 0
        %vm501 = vcmp.eq.s32.totalorder %v500, 1
        %v502 = vsel %vm501, %v498, -10000.0
        %v503 = vsel %vm501, %v499, -10000.0
        %v504 = vsel %vm450, %v502, -inf
        %505 = vmax.xlane.f32.xlu0 %v504
        %v506 = vpop.xlane.xlu0 %505
        %v507 = vsel %vm450, %v503, -inf
        %508 = vmax.xlane.f32.xlu0 %v507
        %v509 = vpop.xlane.xlu0 %508
        %v510 = vsub.f32 %v502, %v506
        %v511 = vsub.f32 %v503, %v509
        %v512 = vmul.f32 %v510, 1.442695
        %v513 = vpow.pop %v512
        %v514 = vmul.f32 %v511, 1.442695
        %v515 = vpow.pop %v514
        %v516 = vsel %vm450, %v513, 0.0
        %517 = vadd.xlane.f32.xlu0 %v516
        %v518 = vpop.xlane.xlu0 %517
        %v519 = vsel %vm450, %v515, 0.0
        %520 = vadd.xlane.f32.xlu0 %v519
        %v521 = vpop.xlane.xlu0 %520
        %v522 = vrcp.pop %v518
        %v523 = vrcp.pop %v521
        %v524 = vmul.f32 %v513, %v522
        %v525 = vmul.f32 %v515, %v523
        %v526 = vpack.c.bf16 %v525, %v524
        %527 = vrot.lane.b32.xlu0 %v446, 64
        %v528 = vpop.permute.xlu0 %527
        %v531 = vsel %vm450, %v526, 0
        %533 = vmatprep.subr.bf16.mxu0 0
        %534 = vmatpush1.bf16.msra.mxu0 %v528
        %535 = vmatprep.subr.bf16.mxu0 0
        %536 = vmatpush1.bf16.msra.mxu0 0
        %537 = vmatprep.subr.bf16.mxu0 0
        %538 = vmatpush1.bf16.msra.mxu0 0
        %539 = vmatprep.subr.bf16.mxu0 0
        %540 = vmatpush1.bf16.msra.mxu0 0
        %541 = vmatprep.subr.bf16.mxu0 0
        %542 = vmatpush1.bf16.msra.mxu0 0
        %543 = vmatprep.subr.bf16.mxu0 0
        %544 = vmatpush1.bf16.msra.mxu0 0
        %545 = vmatprep.subr.bf16.mxu0 0
        %546 = vmatpush1.bf16.msra.mxu0 0
        %547 = vmatprep.subr.bf16.mxu0 0
        %548 = vmatpush1.bf16.msra.mxu0 0
        %549 = vmatprep.subr.bf16.mxu0 0
        %550 = vmatpush1.bf16.msra.mxu0 0
        %551 = vmatprep.subr.bf16.mxu0 0
        %552 = vmatpush1.bf16.msra.mxu0 0
        %553 = vmatprep.subr.bf16.mxu0 0
        %554 = vmatpush1.bf16.msra.mxu0 0
        %555 = vmatprep.subr.bf16.mxu0 0
        %556 = vmatpush1.bf16.msra.mxu0 0
        %557 = vmatprep.subr.bf16.mxu0 0
        %558 = vmatpush1.bf16.msra.mxu0 0
        %559 = vmatprep.subr.bf16.mxu0 0
        %560 = vmatpush1.bf16.msra.mxu0 0
        %561 = vmatprep.subr.bf16.mxu0 0
        %562 = vmatpush1.bf16.msra.mxu0 0
        %563 = vmatprep.subr.bf16.mxu0 0
        %564 = vmatpush1.bf16.msra.mxu0 0
        %565 = vmatprep.mubr.bf16.mxu0 0
        %566 = vmatmul.mubr.bf16.gmra.mrb[0].mxu0 %v531
        %v567 = vpop.f32.mrb[0].mxu0
        %v568 = vadd.f32 0.0, %v567
        %v569 = vpop.f32.mrb[0].mxu0
        %v570 = vpop.f32.mrb[0].mxu0
        %v571 = vadd.f32 0.0, %v570
        %v572 = vpop.f32.mrb[0].mxu0
        %573 = vdwg.mxu0
        %v574 = vpack.c.bf16 %v571, %v568
        %v575 = vld [vmem:[#allocation9] sm:$0xf]
        %v576 = vld [vmem:[#allocation9 + $0x4] sm:$0xf]
        %577 = vrot.lane.b32.xlu0 %v446, 112
        %v578 = vpop.permute.xlu0 %577
        %579 = vrot.lane.b32.xlu0 %v446, 80
        %v580 = vpop.permute.xlu0 %579
        %v582 = vsel %vm450, %v578, 0
        %v585 = vsel %vm450, %v580, 0
        %587 = vmatprep.subr.bf16.mxu0 0
        %588 = vmatpush1.bf16.xpose.msra.mxu0 %v585
        %589 = vmatprep.subr.bf16.mxu0 0
        %590 = vmatpush1.bf16.xpose.msra.mxu0 0
        %591 = vmatprep.subr.bf16.mxu0 0
        %592 = vmatpush1.bf16.xpose.msra.mxu0 0
        %593 = vmatprep.subr.bf16.mxu0 0
        %594 = vmatpush1.bf16.xpose.msra.mxu0 0
        %595 = vmatprep.subr.bf16.mxu0 0
        %596 = vmatpush1.bf16.xpose.msra.mxu0 0
        %597 = vmatprep.subr.bf16.mxu0 0
        %598 = vmatpush1.bf16.xpose.msra.mxu0 0
        %599 = vmatprep.subr.bf16.mxu0 0
        %600 = vmatpush1.bf16.xpose.msra.mxu0 0
        %601 = vmatprep.subr.bf16.mxu0 0
        %602 = vmatpush1.bf16.xpose.msra.mxu0 0
        %603 = vmatprep.subr.bf16.mxu0 0
        %604 = vmatpush1.bf16.xpose.msra.mxu0 0
        %605 = vmatprep.subr.bf16.mxu0 0
        %606 = vmatpush1.bf16.xpose.msra.mxu0 0
        %607 = vmatprep.subr.bf16.mxu0 0
        %608 = vmatpush1.bf16.xpose.msra.mxu0 0
        %609 = vmatprep.subr.bf16.mxu0 0
        %610 = vmatpush1.bf16.xpose.msra.mxu0 0
        %611 = vmatprep.subr.bf16.mxu0 0
        %612 = vmatpush1.bf16.xpose.msra.mxu0 0
        %613 = vmatprep.subr.bf16.mxu0 0
        %614 = vmatpush1.bf16.xpose.msra.mxu0 0
        %615 = vmatprep.subr.bf16.mxu0 0
        %616 = vmatpush1.bf16.xpose.msra.mxu0 0
        %617 = vmatprep.subr.bf16.mxu0 0
        %618 = vmatpush1.bf16.xpose.msra.mxu0 0
        %619 = vmatprep.mubr.bf16.mxu0 0
        %620 = vmatmul.mubr.bf16.gmra.mrb[0].mxu0 %v582
        %v621 = vpop.f32.mrb[0].mxu0
        %v622 = vadd.f32 0.0, %v621
        %v623 = vpop.f32.mrb[0].mxu0
        %v624 = vpop.f32.mrb[0].mxu0
        %v625 = vadd.f32 0.0, %v624
        %v626 = vpop.f32.mrb[0].mxu0
        %627 = vdwg.mxu0
        %v628 = vmul.f32 %v622, 0.25
        %v629 = vmul.f32 %v625, 0.25
        %v630 = vsel %vm501, %v628, -10000.0
        %v631 = vsel %vm501, %v629, -10000.0
        %v632 = vsel %vm450, %v630, -inf
        %633 = vmax.xlane.f32.xlu0 %v632
        %v634 = vpop.xlane.xlu0 %633
        %v635 = vsel %vm450, %v631, -inf
        %636 = vmax.xlane.f32.xlu0 %v635
        %v637 = vpop.xlane.xlu0 %636
        %v638 = vsub.f32 %v630, %v634
        %v639 = vsub.f32 %v631, %v637
        %v640 = vmul.f32 %v638, 1.442695
        %v641 = vpow.pop %v640
        %v642 = vmul.f32 %v639, 1.442695
        %v643 = vpow.pop %v642
        %v644 = vsel %vm450, %v641, 0.0
        %645 = vadd.xlane.f32.xlu0 %v644
        %v646 = vpop.xlane.xlu0 %645
        %v647 = vsel %vm450, %v643, 0.0
        %648 = vadd.xlane.f32.xlu0 %v647
        %v649 = vpop.xlane.xlu0 %648
        %v650 = vrcp.pop %v646
        %v651 = vrcp.pop %v649
        %v652 = vmul.f32 %v641, %v650
        %v653 = vmul.f32 %v643, %v651
        %v654 = vpack.c.bf16 %v653, %v652
        %655 = vrot.lane.b32.xlu0 %v446, 48
        %v656 = vpop.permute.xlu0 %655
        %v659 = vsel %vm450, %v654, 0
        %661 = vmatprep.subr.bf16.mxu0 0
        %662 = vmatpush1.bf16.msra.mxu0 %v656
        %663 = vmatprep.subr.bf16.mxu0 0
        %664 = vmatpush1.bf16.msra.mxu0 0
        %665 = vmatprep.subr.bf16.mxu0 0
        %666 = vmatpush1.bf16.msra.mxu0 0
        %667 = vmatprep.subr.bf16.mxu0 0
        %668 = vmatpush1.bf16.msra.mxu0 0
        %669 = vmatprep.subr.bf16.mxu0 0
        %670 = vmatpush1.bf16.msra.mxu0 0
        %671 = vmatprep.subr.bf16.mxu0 0
        %672 = vmatpush1.bf16.msra.mxu0 0
        %673 = vmatprep.subr.bf16.mxu0 0
        %674 = vmatpush1.bf16.msra.mxu0 0
        %675 = vmatprep.subr.bf16.mxu0 0
        %676 = vmatpush1.bf16.msra.mxu0 0
        %677 = vmatprep.subr.bf16.mxu0 0
        %678 = vmatpush1.bf16.msra.mxu0 0
        %679 = vmatprep.subr.bf16.mxu0 0
        %680 = vmatpush1.bf16.msra.mxu0 0
        %681 = vmatprep.subr.bf16.mxu0 0
        %682 = vmatpush1.bf16.msra.mxu0 0
        %683 = vmatprep.subr.bf16.mxu0 0
        %684 = vmatpush1.bf16.msra.mxu0 0
        %685 = vmatprep.subr.bf16.mxu0 0
        %686 = vmatpush1.bf16.msra.mxu0 0
        %687 = vmatprep.subr.bf16.mxu0 0
        %688 = vmatpush1.bf16.msra.mxu0 0
        %689 = vmatprep.subr.bf16.mxu0 0
        %690 = vmatpush1.bf16.msra.mxu0 0
        %691 = vmatprep.subr.bf16.mxu0 0
        %692 = vmatpush1.bf16.msra.mxu0 0
        %693 = vmatprep.mubr.bf16.mxu0 0
        %694 = vmatmul.mubr.bf16.gmra.mrb[0].mxu0 %v659
        %v695 = vpop.f32.mrb[0].mxu0
        %v696 = vadd.f32 0.0, %v695
        %v697 = vpop.f32.mrb[0].mxu0
        %v698 = vpop.f32.mrb[0].mxu0
        %v699 = vadd.f32 0.0, %v698
        %v700 = vpop.f32.mrb[0].mxu0
        %701 = vdwg.mxu0
        %v702 = vpack.c.bf16 %v699, %v696
        %v703 = vld [vmem:[#allocation9 + $0x8] sm:$0xf]
        %v704 = vld [vmem:[#allocation9 + $0xc] sm:$0xf]
        %v707 = vunpack.c.l.b16 %v703
        %v708 = vunpack.c.l.b16 %v704
        %v709 = vpack.c.b16 %v708, %v707
        %v712 = vsel %vm450, %v702, 0
        %714 = vmatprep.subr.bf16.mxu0 0
        %715 = vmatpush1.bf16.msra.mxu0 %v709
        %716 = vmatprep.subr.bf16.mxu0 0
        %717 = vmatpush1.bf16.msra.mxu0 0
        %718 = vmatprep.subr.bf16.mxu0 0
        %719 = vmatpush1.bf16.msra.mxu0 0
        %720 = vmatprep.subr.bf16.mxu0 0
        %721 = vmatpush1.bf16.msra.mxu0 0
        %722 = vmatprep.subr.bf16.mxu0 0
        %723 = vmatpush1.bf16.msra.mxu0 0
        %724 = vmatprep.subr.bf16.mxu0 0
        %725 = vmatpush1.bf16.msra.mxu0 0
        %726 = vmatprep.subr.bf16.mxu0 0
        %727 = vmatpush1.bf16.msra.mxu0 0
        %728 = vmatprep.subr.bf16.mxu0 0
        %729 = vmatpush1.bf16.msra.mxu0 0
        %730 = vmatprep.subr.bf16.mxu0 0
        %731 = vmatpush1.bf16.msra.mxu0 0
        %732 = vmatprep.subr.bf16.mxu0 0
        %733 = vmatpush1.bf16.msra.mxu0 0
        %734 = vmatprep.subr.bf16.mxu0 0
        %735 = vmatpush1.bf16.msra.mxu0 0
        %736 = vmatprep.subr.bf16.mxu0 0
        %737 = vmatpush1.bf16.msra.mxu0 0
        %738 = vmatprep.subr.bf16.mxu0 0
        %739 = vmatpush1.bf16.msra.mxu0 0
        %740 = vmatprep.subr.bf16.mxu0 0
        %741 = vmatpush1.bf16.msra.mxu0 0
        %742 = vmatprep.subr.bf16.mxu0 0
        %743 = vmatpush1.bf16.msra.mxu0 0
        %744 = vmatprep.subr.bf16.mxu0 0
        %745 = vmatpush1.bf16.msra.mxu0 0
        %746 = vmatprep.mubr.bf16.mxu0 0
        %747 = vmatmul.mubr.bf16.gmra.mrb[0].mxu0 %v712
        %v748 = vpop.f32.mrb[0].mxu0
        %v749 = vadd.f32 0.0, %v748
        %v750 = vpop.f32.mrb[0].mxu0
        %v751 = vpop.f32.mrb[0].mxu0
        %v752 = vadd.f32 0.0, %v751
        %v753 = vpop.f32.mrb[0].mxu0
        %754 = vdwg.mxu0
        %v757 = vunpack.c.l.b16 %v575
        %v758 = vunpack.c.l.b16 %v576
        %v759 = vpack.c.b16 %v758, %v757
        %v762 = vsel %vm450, %v574, 0
        %764 = vmatprep.subr.bf16.mxu0 0
        %765 = vmatpush1.bf16.msra.mxu0 %v759
        %766 = vmatprep.subr.bf16.mxu0 0
        %767 = vmatpush1.bf16.msra.mxu0 0
        %768 = vmatprep.subr.bf16.mxu0 0
        %769 = vmatpush1.bf16.msra.mxu0 0
        %770 = vmatprep.subr.bf16.mxu0 0
        %771 = vmatpush1.bf16.msra.mxu0 0
        %772 = vmatprep.subr.bf16.mxu0 0
        %773 = vmatpush1.bf16.msra.mxu0 0
        %774 = vmatprep.subr.bf16.mxu0 0
        %775 = vmatpush1.bf16.msra.mxu0 0
        %776 = vmatprep.subr.bf16.mxu0 0
        %777 = vmatpush1.bf16.msra.mxu0 0
        %778 = vmatprep.subr.bf16.mxu0 0
        %779 = vmatpush1.bf16.msra.mxu0 0
        %780 = vmatprep.subr.bf16.mxu0 0
        %781 = vmatpush1.bf16.msra.mxu0 0
        %782 = vmatprep.subr.bf16.mxu0 0
        %783 = vmatpush1.bf16.msra.mxu0 0
        %784 = vmatprep.subr.bf16.mxu0 0
        %785 = vmatpush1.bf16.msra.mxu0 0
        %786 = vmatprep.subr.bf16.mxu0 0
        %787 = vmatpush1.bf16.msra.mxu0 0
        %788 = vmatprep.subr.bf16.mxu0 0
        %789 = vmatpush1.bf16.msra.mxu0 0
        %790 = vmatprep.subr.bf16.mxu0 0
        %791 = vmatpush1.bf16.msra.mxu0 0
        %792 = vmatprep.subr.bf16.mxu0 0
        %793 = vmatpush1.bf16.msra.mxu0 0
        %794 = vmatprep.subr.bf16.mxu0 0
        %795 = vmatpush1.bf16.msra.mxu0 0
        %796 = vmatprep.mubr.bf16.mxu0 0
        %797 = vmatmul.mubr.bf16.gmra.mrb[0].mxu0 %v762
        %v798 = vpop.f32.mrb[0].mxu0
        %v799 = vadd.f32 %v749, %v798
        %v800 = vpop.f32.mrb[0].mxu0
        %v801 = vpop.f32.mrb[0].mxu0
        %v802 = vadd.f32 %v752, %v801
        %v803 = vpop.f32.mrb[0].mxu0
        %804 = vdwg.mxu0
        %v805 = vld [vmem:[%s5] sm:$0x1]
        %v807 = vlaneseq
        %v808 = vshrl.u32 %v807, 7
        %v809 = vsub.s32 0, %v808
        %v810 = vrot.slane %v805, %v809
        %v812 = vadd.f32 %v799, %v810
        %v813 = vadd.f32 %v802, %v810
        %v814 = vunpack.c.l.bf16 %v366
        %v815 = vunpack.c.l.bf16 %v367
        %v816 = vadd.f32 %v814, %v812
        %v817 = vadd.f32 %v815, %v813
        %v818 = vsel %vm396, %v816, 0.0
        %819 = vadd.xlane.f32.xlu0 %v818
        %v820 = vpop.xlane.xlu0 %819
        %v821 = vsel %vm396, %v817, 0.0
        %822 = vadd.xlane.f32.xlu0 %v821
        %v823 = vpop.xlane.xlu0 %822
        %v824 = vrcp.pop 32.0
        %v825 = vmul.f32 %v820, %v824
        %v826 = vmul.f32 %v823, %v824
        %v827 = vsub.f32 %v816, %v825
        %v828 = vsub.f32 %v817, %v826
        %v829 = vmul.f32 %v827, %v827
        %v830 = vmul.f32 %v828, %v828
        %v831 = vsel %vm396, %v829, 0.0
        %832 = vadd.xlane.f32.xlu0 %v831
        %v833 = vpop.xlane.xlu0 %832
        %v834 = vsel %vm396, %v830, 0.0
        %835 = vadd.xlane.f32.xlu0 %v834
        %v836 = vpop.xlane.xlu0 %835
        %v837 = vmul.f32 %v833, %v824
        %v838 = vmul.f32 %v836, %v824
        %v839 = vadd.f32 %v837, 1e-05
        %v840 = vadd.f32 %v838, 1e-05
        %v841 = vrsqrt.pop %v839
        %v842 = vrsqrt.pop %v840
        %v843 = vmul.f32 %v827, %v841
        %v844 = vmul.f32 %v828, %v842
        %v845 = vld [vmem:[%s6] sm:$0x1]
        %v847 = vlaneseq
        %v848 = vshrl.u32 %v847, 7
        %v849 = vsub.s32 0, %v848
        %v850 = vrot.slane %v845, %v849
        %v852 = vmul.f32 %v843, %v850
        %v853 = vmul.f32 %v844, %v850
        %v854 = vld [vmem:[%s7] sm:$0x1]
        %v856 = vlaneseq
        %v857 = vshrl.u32 %v856, 7
        %v858 = vsub.s32 0, %v857
        %v859 = vrot.slane %v854, %v858
        %v861 = vadd.f32 %v852, %v859
        %v862 = vadd.f32 %v853, %v859
        %v863 = vpack.c.bf16 %v862, %v861
        %v865 = vunpack.c.l.b16 %v863
        %v866 = vunpack.c.h.b16 %v863
        %v867 = vpack.c.b16 %v865, %v865
        %v868 = vpack.c.b16 %v866, %v866
        %vm871 = vcmask 257024
        %872 = vst.msk [vmem:[%s364] sm:$0xf] %vm871, %v867
        %873 = vst.msk [vmem:[%s364 + $0x4] sm:$0xf] %vm871, %v868
        %s874 = sand.u32 %s208, 1
        %s875 = scalar_lea.sflag [#allocation4], %s874
        %s876 = sand.u32 %s208, 1
        %s877 = smul.addr %s876, 8
        %s878 = scalar_lea.vmem [#allocation10], %s877
        // Predicated region
        $region69: #{tpu_custom_call.1} parent=51 // pred_check
          %p879 = pneg %p218
        $region70: #{tpu_custom_call.1} parent=51 // pred_check_branch
          %881 = sbr.rel (%p879) target = $region72
        $region71: #{tpu_custom_call.1} parent=51 // pred_region
          %s883 = ssub.s32 128, 128
          %884 = vsyncadd %s875, %s883
          %s885 = smul.addr %s27, 2
          %s886 = smul.addr %s885, 64
          %s887 = scalar_lea.hbm %s8, %s886
          %s888 = sshll.u32 %s878, 4
          %s889 = int_to_ptr.vmem [resolvable:$true] %s888
          %894 = dma.vmem_to_hbm [thread:$0]  %s889, 128, %s887, %s875, 64, 64, 4
        $region72: #{tpu_custom_call.1} parent=51 // pred_fallthru
          _
      $region52: #{tpu_custom_call.1} parent=5 // pred_fallthru
        _
      %p895 = scmp.le.s32.totalorder 2, %s22
      // Predicated region
      $region73: #{tpu_custom_call.1} parent=5 // pred_check
        %p896 = pneg %p895
      $region74: #{tpu_custom_call.1} parent=5 // pred_check_branch
        %898 = sbr.rel (%p896) target = $region76
      $region75: #{tpu_custom_call.1} parent=5 // pred_region
        %s899 = ssub.s32 %s22, 2
        // Predicated region
        $region77: #{tpu_custom_call.1} parent=75 // pred_check
          %p900 = pneg %p224
        $region78: #{tpu_custom_call.1} parent=75 // pred_check_branch
          %902 = sbr.rel (%p900) target = $region80
        $region79: #{tpu_custom_call.1} parent=75 // pred_region
          %s903 = sand.u32 %s209, 1
          %s904 = scalar_lea.sflag [#allocation4], %s903
          %s905 = sand.u32 %s209, 1
          %s906 = smul.addr %s905, 8
          %s907 = scalar_lea.vmem [#allocation10], %s906
          %908 = dma.done %s904, 128
        $region80: #{tpu_custom_call.1} parent=75 // pred_fallthru
          _
      $region76: #{tpu_custom_call.1} parent=5 // pred_fallthru
        _
    $region6: #{tpu_custom_call.1} parent=1 // loop_footer
      %s26 = sadd.s32 1, %s22
    $region7: #{tpu_custom_call.1} parent=1 // loop_footer_branch
      %21 = sbr.rel target = $region3
    $region8: #{tpu_custom_call.1} parent=1 // loop_exit
      _
    %909 = vsyncpa [#allocation3], 1
    %s910 = scalar_lea.sflag [#allocation3], 1
    %911 = vsyncpa %s910, 1
    %912 = vsyncpa [#allocation8], 1
    %913 = vsyncpa [#allocation4], 1
    %s914 = scalar_lea.sflag [#allocation4], 1
    %915 = vsyncpa %s914, 1
    %916 = vsyncpa [#allocation5], 1
    %s917 = scalar_lea.sflag [#allocation5], 1
    %918 = vsyncpa %s917, 1

</llo_original>
